<compile_context>
chip_gen: v6e
topology: v6e:2x2x1
jax: 0.10.0
libtpu: 0.0.40
codegen_flags: <defaults>
</compile_context>

<pallas_src>
import jax
import jax.numpy as jnp
from jax.experimental import pallas as pl
from jax.experimental.pallas import tpu as pltpu


def fused_actor_critic_kernel(x_ref, w1_ref, b1_ref, w2_ref, b2_ref, out_ref):
    # Layer 1 (actor+critic fused): Linear -> (Dropout=identity, eval) -> ReLU
    x = x_ref[...]
    h = jnp.dot(x, w1_ref[...], preferred_element_type=jnp.float32) + b1_ref[...]
    h = jnp.maximum(h, 0.0)

    # Layer 2 (block-diagonal fusion): one matmul yields [action | value]
    out_ref[...] = (
        jnp.dot(h, w2_ref[...], preferred_element_type=jnp.float32) + b2_ref[...]
    ).astype(out_ref.dtype)

    # TODO(synk): training-mode dropout (stochastic masking) not implemented;
    # eval-mode (identity) semantics are used, matching inference.


def actor_critic_forward(state, params, *, block_b=512):
    """state: [B, D] float32. params: dict of actor/critic weights.

    Returns (action_pred [B, A], value_pred [B, 1]).
    """
    B, D = state.shape
    H = params["w1a"].shape[1]
    A = params["w2a"].shape[1]
    n_out = A + 1

    # ---- wrapper-side fusion (plain JAX, outside the kernel) --------------
    # First-layer: [D, 2H] weight, [1, 2H] bias.
    w1 = jnp.concatenate([params["w1a"], params["w1c"]], axis=1)
    b1 = jnp.concatenate([params["b1a"], params["b1c"]], axis=1)
    # Second-layer: block-diagonal [2H, A+1] (exact f32 zeros off-diagonal).
    w2 = jnp.zeros((2 * H, n_out), jnp.float32)
    w2 = w2.at[:H, :A].set(params["w2a"])
    w2 = w2.at[H:, A:].set(params["w2c"])
    b2 = jnp.concatenate([params["b2a"], params["b2c"]], axis=1)

    # ---- batch grid: tile rows of the batch, keep weights VMEM-resident ---
    TB = min(block_b, B)
    grid = (pl.cdiv(B, TB),)

    out = pl.pallas_call(
        fused_actor_critic_kernel,
        out_shape=jax.ShapeDtypeStruct((B, n_out), jnp.float32),
        grid=grid,
        in_specs=[
            pl.BlockSpec((TB, D), lambda i: (i, 0)),        # state tile
            pl.BlockSpec((D, 2 * H), lambda i: (0, 0)),     # fused w1 (resident)
            pl.BlockSpec((1, 2 * H), lambda i: (0, 0)),     # fused b1
            pl.BlockSpec((2 * H, n_out), lambda i: (0, 0)),  # block-diag w2
            pl.BlockSpec((1, n_out), lambda i: (0, 0)),     # fused b2
        ],
        out_specs=pl.BlockSpec((TB, n_out), lambda i: (i, 0)),
        compiler_params=pltpu.CompilerParams(
            dimension_semantics=("parallel",)),
    )(state, w1, b1, w2, b2)

    # Split combined output back into (action, value).
    return out[:, :A], out[:, A:]


def make_params(key, input_dim, hidden_dim, n_actions):
    """Deterministic synthetic parameters (stored as [in, out])."""
    ks = jax.random.split(key, 8)
    scale1 = 1.0 / jnp.sqrt(jnp.float32(input_dim))
    scale2 = 1.0 / jnp.sqrt(jnp.float32(hidden_dim))
    return {
        # actor
        "w1a": jax.random.normal(ks[0], (input_dim, hidden_dim), jnp.float32) * scale1,
        "b1a": jax.random.normal(ks[1], (1, hidden_dim), jnp.float32) * scale1,
        "w2a": jax.random.normal(ks[2], (hidden_dim, n_actions), jnp.float32) * scale2,
        "b2a": jax.random.normal(ks[3], (1, n_actions), jnp.float32) * scale2,
        # critic
        "w1c": jax.random.normal(ks[4], (input_dim, hidden_dim), jnp.float32) * scale1,
        "b1c": jax.random.normal(ks[5], (1, hidden_dim), jnp.float32) * scale1,
        "w2c": jax.random.normal(ks[6], (hidden_dim, 1), jnp.float32) * scale2,
        "b2c": jax.random.normal(ks[7], (1, 1), jnp.float32) * scale2,
    }


def reference_forward(state, params):
    """Pure-JAX reference (matches the PyTorch module in eval mode)."""
    h_a = jnp.maximum(state @ params["w1a"] + params["b1a"], 0.0)
    action = h_a @ params["w2a"] + params["b2a"]
    h_c = jnp.maximum(state @ params["w1c"] + params["b1c"], 0.0)
    value = h_c @ params["w2c"] + params["b2c"]
    return action, value


if __name__ == "__main__":
    key = jax.random.PRNGKey(0)
    k_state, k_params = jax.random.split(key)

    batch, input_dim, hidden_dim, n_actions = 8, 16, 32, 4
    state = jax.random.normal(k_state, (batch, input_dim), jnp.float32)
    params = make_params(k_params, input_dim, hidden_dim, n_actions)

    action_pred, value_pred = actor_critic_forward(state, params)
    jax.block_until_ready((action_pred, value_pred))

    # sanity check against pure-JAX reference
    ref_action, ref_value = reference_forward(state, params)
    assert action_pred.shape == (batch, n_actions)
    assert value_pred.shape == (batch, 1)
    assert jnp.allclose(action_pred, ref_action, atol=1e-4, rtol=1e-4)
    assert jnp.allclose(value_pred, ref_value, atol=1e-4, rtol=1e-4)

    print("KERNEL_OK")
</pallas_src>

<mosaic_0001>
module attributes {stable_mosaic.version = 11 : i64} {
  func.func @fused_actor_critic_kernel(%arg0: i32, %arg1: memref<8x16xf32, #tpu.memory_space<vmem>>, %arg2: memref<16x64xf32, #tpu.memory_space<vmem>>, %arg3: memref<1x64xf32, #tpu.memory_space<vmem>>, %arg4: memref<64x5xf32, #tpu.memory_space<vmem>>, %arg5: memref<1x5xf32, #tpu.memory_space<vmem>>, %arg6: memref<8x5xf32, #tpu.memory_space<vmem>>) attributes {dimension_semantics = [#tpu.dimension_semantics<parallel>], iteration_bounds = array<i64: 1>, scalar_prefetch = 0 : i64, scratch_operands = 0 : i64, tpu.core_type = #tpu.core_type<tc>, window_params = [{transform_indices = @transform_0, window_bounds = array<i64: 8, 16>}, {pipeline_mode = #tpu.pipeline_mode<synchronous>, transform_indices = @transform_1, window_bounds = array<i64: 16, 64>}, {pipeline_mode = #tpu.pipeline_mode<synchronous>, transform_indices = @transform_2, window_bounds = array<i64: 1, 64>}, {pipeline_mode = #tpu.pipeline_mode<synchronous>, transform_indices = @transform_3, window_bounds = array<i64: 64, 5>}, {pipeline_mode = #tpu.pipeline_mode<synchronous>, transform_indices = @transform_4, window_bounds = array<i64: 1, 5>}, {transform_indices = @transform_5, window_bounds = array<i64: 8, 5>}]} {
    %c0 = arith.constant 0 : index
    %c0_0 = arith.constant 0 : index
    %0 = vector.load %arg1[%c0, %c0_0] : memref<8x16xf32, #tpu.memory_space<vmem>>, vector<8x16xf32>
    %c0_1 = arith.constant 0 : index
    %c0_2 = arith.constant 0 : index
    %1 = vector.load %arg2[%c0_1, %c0_2] : memref<16x64xf32, #tpu.memory_space<vmem>>, vector<16x64xf32>
    %cst = arith.constant dense<0.000000e+00> : vector<8x64xf32>
    %2 = tpu.matmul %0, %1, %cst {dimension_numbers = #tpu.dot_dimension_numbers<[1], [0], [0], [1], [0, 0, 1, 1], [], []>} : vector<8x16xf32>, vector<16x64xf32>, vector<8x64xf32> -> vector<8x64xf32>
    %c0_3 = arith.constant 0 : index
    %c0_4 = arith.constant 0 : index
    %3 = vector.load %arg3[%c0_3, %c0_4] : memref<1x64xf32, #tpu.memory_space<vmem>>, vector<1x64xf32>
    %4 = vector.broadcast %3 : vector<1x64xf32> to vector<8x64xf32>
    %5 = arith.addf %2, %4 : vector<8x64xf32>
    %cst_5 = arith.constant 0.000000e+00 : f32
    %6 = vector.broadcast %cst_5 : f32 to vector<8x64xf32>
    %7 = arith.maximumf %5, %6 : vector<8x64xf32>
    %c0_6 = arith.constant 0 : index
    %c0_7 = arith.constant 0 : index
    %8 = vector.load %arg4[%c0_6, %c0_7] : memref<64x5xf32, #tpu.memory_space<vmem>>, vector<64x5xf32>
    %cst_8 = arith.constant dense<0.000000e+00> : vector<8x5xf32>
    %9 = tpu.matmul %7, %8, %cst_8 {dimension_numbers = #tpu.dot_dimension_numbers<[1], [0], [0], [1], [0, 0, 1, 1], [], []>} : vector<8x64xf32>, vector<64x5xf32>, vector<8x5xf32> -> vector<8x5xf32>
    %c0_9 = arith.constant 0 : index
    %c0_10 = arith.constant 0 : index
    %10 = vector.load %arg5[%c0_9, %c0_10] : memref<1x5xf32, #tpu.memory_space<vmem>>, vector<1x5xf32>
    %11 = vector.broadcast %10 : vector<1x5xf32> to vector<8x5xf32>
    %12 = arith.addf %9, %11 : vector<8x5xf32>
    %c0_11 = arith.constant 0 : index
    %c0_12 = arith.constant 0 : index
    %13 = vector.load %arg6[%c0_11, %c0_12] : memref<8x5xf32, #tpu.memory_space<vmem>>, vector<8x5xf32>
    tpu.vector_store %arg6[%c0_11, %c0_12], %12 {strides = array<i32>} : memref<8x5xf32, #tpu.memory_space<vmem>>, vector<8x5xf32>,
    return
  }
  func.func @transform_0(%arg0: i32) -> (i32, i32) {
    %c0_i32 = arith.constant 0 : i32
    %c0_i32_0 = arith.constant 0 : i32
    return %arg0, %c0_i32 : i32, i32
  }
  func.func @transform_1(%arg0: i32) -> (i32, i32) {
    %c0_i32 = arith.constant 0 : i32
    %c0_i32_0 = arith.constant 0 : i32
    %c0_i32_1 = arith.constant 0 : i32
    return %c0_i32, %c0_i32_0 : i32, i32
  }
  func.func @transform_2(%arg0: i32) -> (i32, i32) {
    %c0_i32 = arith.constant 0 : i32
    %c0_i32_0 = arith.constant 0 : i32
    %c0_i32_1 = arith.constant 0 : i32
    return %c0_i32, %c0_i32_0 : i32, i32
  }
  func.func @transform_3(%arg0: i32) -> (i32, i32) {
    %c0_i32 = arith.constant 0 : i32
    %c0_i32_0 = arith.constant 0 : i32
    %c0_i32_1 = arith.constant 0 : i32
    return %c0_i32, %c0_i32_0 : i32, i32
  }
  func.func @transform_4(%arg0: i32) -> (i32, i32) {
    %c0_i32 = arith.constant 0 : i32
    %c0_i32_0 = arith.constant 0 : i32
    %c0_i32_1 = arith.constant 0 : i32
    return %c0_i32, %c0_i32_0 : i32, i32
  }
  func.func @transform_5(%arg0: i32) -> (i32, i32) {
    %c0_i32 = arith.constant 0 : i32
    %c0_i32_0 = arith.constant 0 : i32
    return %arg0, %c0_i32 : i32, i32
  }
}

</mosaic_0001>

<llo_original>
// kernel: tpu_custom_call.1
$region0: #{tpu_custom_call.1}
  #allocation0 [shape = 'u32[]', space=smem, size = 0x4, offset = 0x4, fixed_abs, tag = 'smem constant byte address 0x4 - core index']
  #allocation1 [shape = 'u32[144,128]{1,0:T(1,128)}', space=vmem, size = 0x12000, scoped, tag = 'internal scratch']
  %s0 = inlined_call_operand.vmem [shape: f32[8,16], index: 0, kind: input, shape index: {}]
  %s1 = inlined_call_operand.vmem [shape: f32[16,64], index: 1, kind: input, shape index: {}]
  %s2 = inlined_call_operand.vmem [shape: f32[1,64], index: 2, kind: input, shape index: {}]
  %s3 = inlined_call_operand.vmem [shape: f32[64,5], index: 3, kind: input, shape index: {}]
  %s4 = inlined_call_operand.vmem [shape: f32[1,5], index: 4, kind: input, shape index: {}]
  %s5 = inlined_call_operand.hbm [shape: f32[8,5], index: 5, kind: output, shape index: {}]
  %s6 = sld [smem:[#allocation0]]
  $region30: #{tpu_custom_call.1} parent=0
    _
  %s8 = ssub.s32 1, %s6
  %s9 = scalar_select 0, %s8, %s6
  $region1: #{tpu_custom_call.1} parent=0
    #allocation2 [shape = 'u8[4096]{0}', space=vmem, size = 0x1000, scoped, tag = 'output window, operand 0, single buffered']
    #allocation3 [shape = 's32[1]{0}', space=sflag, size = 0x4, scoped, tag = 'scoped memory for tpu_custom_call.1']
    %10 = vsyncpa [#allocation3], 0
    // Predicated region
    $region2: #{tpu_custom_call.1} parent=1 // pred_check
      _
    $region3: #{tpu_custom_call.1} parent=1 // pred_check_branch
      %12 = sbr.rel (0) target = $region5
    $region4: #{tpu_custom_call.1} parent=1 // pred_region
      _
    $region5: #{tpu_custom_call.1} parent=1 // pred_fallthru
      _
    // Predicated region
    $region6: #{tpu_custom_call.1} parent=1 // pred_check
      _
    $region7: #{tpu_custom_call.1} parent=1 // pred_check_branch
      %14 = sbr.rel (0) target = $region9
    $region8: #{tpu_custom_call.1} parent=1 // pred_region
      _
    $region9: #{tpu_custom_call.1} parent=1 // pred_fallthru
      _
    // Predicated region
    $region10: #{tpu_custom_call.1} parent=1 // pred_check
      _
    $region11: #{tpu_custom_call.1} parent=1 // pred_check_branch
      %16 = sbr.rel (0) target = $region13
    $region12: #{tpu_custom_call.1} parent=1 // pred_region
      _
    $region13: #{tpu_custom_call.1} parent=1 // pred_fallthru
      _
    // Predicated region
    $region14: #{tpu_custom_call.1} parent=1 // pred_check
      _
    $region15: #{tpu_custom_call.1} parent=1 // pred_check_branch
      %18 = sbr.rel (0) target = $region17
    $region16: #{tpu_custom_call.1} parent=1 // pred_region
      _
    $region17: #{tpu_custom_call.1} parent=1 // pred_fallthru
      _
    // Predicated region
    $region18: #{tpu_custom_call.1} parent=1 // pred_check
      _
    $region19: #{tpu_custom_call.1} parent=1 // pred_check_branch
      %20 = sbr.rel (0) target = $region21
    $region20: #{tpu_custom_call.1} parent=1 // pred_region
      _
    $region21: #{tpu_custom_call.1} parent=1 // pred_fallthru
      _
    %v21 = vld [vmem:[%s0] sm:$0xff]
    %v22 = vld [vmem:[%s1] sm:$0xff]
    %v23 = vld [vmem:[%s1 + $0x8] sm:$0xff]
    %v24 = vld [vmem:[%s2] sm:$0x1]
    %v26 = vlaneseq
    %v27 = vshrl.u32 %v26, 7
    %v28 = vsub.s32 0, %v27
    %v29 = vrot.slane %v24, %v28
    %vm31 = vcmask 130048
    %v33 = vsel %vm31, %v21, 0
    %35 = vmatprep.subr.mxu0 0.0
    %36 = vmatpush1.msra.mxu0 0.0
    %37 = vmatprep.subr.mxu0 0.0
    %38 = vmatpush1.msra.mxu0 0.0
    %39 = vmatprep.subr.mxu0 0.0
    %40 = vmatpush1.msra.mxu0 0.0
    %41 = vmatprep.subr.mxu0 0.0
    %42 = vmatpush1.msra.mxu0 0.0
    %43 = vmatprep.subr.mxu0 0.0
    %44 = vmatpush1.msra.mxu0 0.0
    %45 = vmatprep.subr.mxu0 0.0
    %46 = vmatpush1.msra.mxu0 0.0
    %47 = vmatprep.subr.mxu0 0.0
    %48 = vmatpush1.msra.mxu0 0.0
    %49 = vmatprep.subr.mxu0 0.0
    %50 = vmatpush1.msra.mxu0 0.0
    %51 = vmatprep.subr.mxu0 0.0
    %52 = vmatpush1.msra.mxu0 0.0
    %53 = vmatprep.subr.mxu0 0.0
    %54 = vmatpush1.msra.mxu0 0.0
    %55 = vmatprep.subr.mxu0 0.0
    %56 = vmatpush1.msra.mxu0 0.0
    %57 = vmatprep.subr.mxu0 0.0
    %58 = vmatpush1.msra.mxu0 0.0
    %59 = vmatprep.subr.mxu0 0.0
    %60 = vmatpush1.msra.mxu0 0.0
    %61 = vmatprep.subr.mxu0 0.0
    %62 = vmatpush1.msra.mxu0 0.0
    %63 = vmatprep.subr.mxu0 0.0
    %64 = vmatpush1.msra.mxu0 %v23
    %65 = vmatprep.subr.mxu0 0.0
    %66 = vmatpush1.msra.mxu0 %v22
    %67 = vmatprep.subr.mxu0 0.0
    %68 = vmatpush2.msra.mxu0 0.0
    %69 = vmatprep.subr.mxu0 0.0
    %70 = vmatpush2.msra.mxu0 0.0
    %71 = vmatprep.subr.mxu0 0.0
    %72 = vmatpush2.msra.mxu0 0.0
    %73 = vmatprep.subr.mxu0 0.0
    %74 = vmatpush2.msra.mxu0 0.0
    %75 = vmatprep.subr.mxu0 0.0
    %76 = vmatpush2.msra.mxu0 0.0
    %77 = vmatprep.subr.mxu0 0.0
    %78 = vmatpush2.msra.mxu0 0.0
    %79 = vmatprep.subr.mxu0 0.0
    %80 = vmatpush2.msra.mxu0 0.0
    %81 = vmatprep.subr.mxu0 0.0
    %82 = vmatpush2.msra.mxu0 0.0
    %83 = vmatprep.subr.mxu0 0.0
    %84 = vmatpush2.msra.mxu0 0.0
    %85 = vmatprep.subr.mxu0 0.0
    %86 = vmatpush2.msra.mxu0 0.0
    %87 = vmatprep.subr.mxu0 0.0
    %88 = vmatpush2.msra.mxu0 0.0
    %89 = vmatprep.subr.mxu0 0.0
    %90 = vmatpush2.msra.mxu0 0.0
    %91 = vmatprep.subr.mxu0 0.0
    %92 = vmatpush2.msra.mxu0 0.0
    %93 = vmatprep.subr.mxu0 0.0
    %94 = vmatpush2.msra.mxu0 0.0
    %95 = vmatprep.subr.mxu0 0.0
    %96 = vmatpush2.msra.mxu0 0.0
    %97 = vmatprep.subr.mxu0 0.0
    %98 = vmatpush2.msra.mxu0 0.0
    %99 = vmatprep.mubr.f32.mxu0 0.0
    %100 = vmatmul.mubr.f32.gmra.mxu0 %v33
    %v101 = vpop.f32.mrf.mxu0
    %v102 = vadd.f32 %v29, %v101
    %v103 = vpop.f32.mrf.mxu0
    %104 = vdwg.mxu0
    %v105 = vmax.f32 %v102, 0.0
    %v106 = vld [vmem:[%s3] sm:$0xff]
    %v107 = vld [vmem:[%s3 + $0x8] sm:$0xff]
    %v108 = vld [vmem:[%s3 + $0x10] sm:$0xff]
    %v109 = vld [vmem:[%s3 + $0x18] sm:$0xff]
    %v110 = vld [vmem:[%s3 + $0x20] sm:$0xff]
    %v111 = vld [vmem:[%s3 + $0x28] sm:$0xff]
    %v112 = vld [vmem:[%s3 + $0x30] sm:$0xff]
    %v113 = vld [vmem:[%s3 + $0x38] sm:$0xff]
    %v114 = vld [vmem:[%s4] sm:$0x1]
    %v116 = vlaneseq
    %v117 = vshrl.u32 %v116, 7
    %v118 = vsub.s32 0, %v117
    %v119 = vrot.slane %v114, %v118
    %vm121 = vcmask 523264
    %v123 = vsel %vm121, %v105, 0
    %125 = vmatprep.subr.mxu0 0.0
    %126 = vmatpush1.msra.mxu0 0.0
    %127 = vmatprep.subr.mxu0 0.0
    %128 = vmatpush1.msra.mxu0 0.0
    %129 = vmatprep.subr.mxu0 0.0
    %130 = vmatpush1.msra.mxu0 0.0
    %131 = vmatprep.subr.mxu0 0.0
    %132 = vmatpush1.msra.mxu0 0.0
    %133 = vmatprep.subr.mxu0 0.0
    %134 = vmatpush1.msra.mxu0 0.0
    %135 = vmatprep.subr.mxu0 0.0
    %136 = vmatpush1.msra.mxu0 0.0
    %137 = vmatprep.subr.mxu0 0.0
    %138 = vmatpush1.msra.mxu0 0.0
    %139 = vmatprep.subr.mxu0 0.0
    %140 = vmatpush1.msra.mxu0 0.0
    %141 = vmatprep.subr.mxu0 0.0
    %142 = vmatpush1.msra.mxu0 %v113
    %143 = vmatprep.subr.mxu0 0.0
    %144 = vmatpush1.msra.mxu0 %v112
    %145 = vmatprep.subr.mxu0 0.0
    %146 = vmatpush1.msra.mxu0 %v111
    %147 = vmatprep.subr.mxu0 0.0
    %148 = vmatpush1.msra.mxu0 %v110
    %149 = vmatprep.subr.mxu0 0.0
    %150 = vmatpush1.msra.mxu0 %v109
    %151 = vmatprep.subr.mxu0 0.0
    %152 = vmatpush1.msra.mxu0 %v108
    %153 = vmatprep.subr.mxu0 0.0
    %154 = vmatpush1.msra.mxu0 %v107
    %155 = vmatprep.subr.mxu0 0.0
    %156 = vmatpush1.msra.mxu0 %v106
    %157 = vmatprep.subr.mxu0 0.0
    %158 = vmatpush2.msra.mxu0 0.0
    %159 = vmatprep.subr.mxu0 0.0
    %160 = vmatpush2.msra.mxu0 0.0
    %161 = vmatprep.subr.mxu0 0.0
    %162 = vmatpush2.msra.mxu0 0.0
    %163 = vmatprep.subr.mxu0 0.0
    %164 = vmatpush2.msra.mxu0 0.0
    %165 = vmatprep.subr.mxu0 0.0
    %166 = vmatpush2.msra.mxu0 0.0
    %167 = vmatprep.subr.mxu0 0.0
    %168 = vmatpush2.msra.mxu0 0.0
    %169 = vmatprep.subr.mxu0 0.0
    %170 = vmatpush2.msra.mxu0 0.0
    %171 = vmatprep.subr.mxu0 0.0
    %172 = vmatpush2.msra.mxu0 0.0
    %173 = vmatprep.subr.mxu0 0.0
    %174 = vmatpush2.msra.mxu0 0.0
    %175 = vmatprep.subr.mxu0 0.0
    %176 = vmatpush2.msra.mxu0 0.0
    %177 = vmatprep.subr.mxu0 0.0
    %178 = vmatpush2.msra.mxu0 0.0
    %179 = vmatprep.subr.mxu0 0.0
    %180 = vmatpush2.msra.mxu0 0.0
    %181 = vmatprep.subr.mxu0 0.0
    %182 = vmatpush2.msra.mxu0 0.0
    %183 = vmatprep.subr.mxu0 0.0
    %184 = vmatpush2.msra.mxu0 0.0
    %185 = vmatprep.subr.mxu0 0.0
    %186 = vmatpush2.msra.mxu0 0.0
    %187 = vmatprep.subr.mxu0 0.0
    %188 = vmatpush2.msra.mxu0 0.0
    %189 = vmatprep.mubr.f32.mxu0 0.0
    %190 = vmatmul.mubr.f32.gmra.mxu0 %v123
    %v191 = vpop.f32.mrf.mxu0
    %v192 = vadd.f32 %v119, %v191
    %v193 = vpop.f32.mrf.mxu0
    %194 = vdwg.mxu0
    %vm195 = vcmask 39936
    %196 = vst.msk [vmem:[#allocation2] sm:$0xff] %vm195, %v192
    // Predicated region
    $region22: #{tpu_custom_call.1} parent=1 // pred_check
      _
    $region23: #{tpu_custom_call.1} parent=1 // pred_check_branch
      %198 = sbr.rel (0) target = $region25
    $region24: #{tpu_custom_call.1} parent=1 // pred_region
      %s200 = ssub.s32 128, 128
      %201 = vsyncadd [#allocation3], %s200
      %s203 = sshll.u32 [#allocation2], 4
      %s204 = int_to_ptr.vmem [resolvable:$true] %s203
      %206 = dma.vmem_to_hbm [thread:$0]  %s204, 128, %s5, [#allocation3]
    $region25: #{tpu_custom_call.1} parent=1 // pred_fallthru
      _
    // Predicated region
    $region26: #{tpu_custom_call.1} parent=1 // pred_check
      _
    $region27: #{tpu_custom_call.1} parent=1 // pred_check_branch
      %208 = sbr.rel (0) target = $region29
    $region28: #{tpu_custom_call.1} parent=1 // pred_region
      %209 = dma.done [#allocation3], 128
    $region29: #{tpu_custom_call.1} parent=1 // pred_fallthru
      _
    %210 = vsyncpa [#allocation3], 1

</llo_original>
